<compile_context>
chip_gen: v5e
topology: v5e:2x2
jax: 0.10.0
libtpu: 0.0.40
codegen_flags: <defaults>
</compile_context>

<pallas_src>
import functools

import jax
import jax.numpy as jnp
from jax import lax
from jax.experimental import pallas as pl
from jax.experimental.pallas import tpu as pltpu

LANES = 128      # vreg lane width
SUBLANES = 8     # f32 sublane tile


def _my_loss_kernel(x_ref, y_ref, w_ref, o_ref, *, n_valid, group, block_rows):
    """One grid step.

    x_ref: (BR, 128)   flat view of x; columns interleaved with period C in lanes
    y_ref: (BR, G)     targets; y_ref[r, g] <-> batch row (i*BR + r)*G + g
    w_ref: (128, G)    constant de-interleave matrix (w[g*C, g]=1000, w[g*C+1, g]=1)
    o_ref: (8, G)      per-step partial sums of squared error
    """
    i = pl.program_id(0)

    # Native-dtype DMA; upcast on the VPU (free under the DMA-bound regime).
    x = x_ref[...].astype(jnp.float32)
    y = y_ref[...].astype(jnp.float32)

    # De-interleave + scale in one MXU matmul:
    #   pred[r, g] = 1000 * x[b, 0] + x[b, 1]  for batch row b = (i*BR + r)*G + g.
    # HIGHEST precision keeps the product f32-exact (the *1000 needs it).
    pred = jnp.dot(x, w_ref[...], preferred_element_type=jnp.float32,
                   precision=lax.Precision.HIGHEST)

    diff = pred - y
    sq = diff * diff

    # Mask padded / out-of-bounds batch rows (partial last block, ragged tail).
    r_idx = lax.broadcasted_iota(jnp.int32, sq.shape, 0)
    g_idx = lax.broadcasted_iota(jnp.int32, sq.shape, 1)
    batch = (i * block_rows + r_idx) * group + g_idx
    sq = jnp.where(batch < n_valid, sq, 0.0)

    # Fold sublane groups with pure VPU adds: (BR, G) -> (BR//8, 8, G) -> (8, G).
    o_ref[...] = jnp.sum(
        sq.reshape(block_rows // SUBLANES, SUBLANES, sq.shape[-1]), axis=0)


def my_loss(x, y, *, block_rows=2048, force_pallas=False):
    """MSE of (x[:, 0]*1000 + x[:, 1]) vs y.  x: [N, C] (C >= 2), y: [N] or [N, 1]."""
    assert x.ndim == 2 and x.shape[1] >= 2
    n, c = x.shape
    y_flat = y.reshape(-1)
    assert y_flat.shape[0] == n

    # Tiny inputs: a fused jnp expression beats any pallas_call launch overhead.
    itemsize = jnp.dtype(x.dtype).itemsize
    if not force_pallas and n * (c + 1) * itemsize < (1 << 20):
        pred = x[:, 0].astype(jnp.float32) * 1000.0 + x[:, 1].astype(jnp.float32)
        d = pred - y_flat.astype(jnp.float32)
        return jnp.mean(d * d)

    # The lane-layout trick needs C | 128.  For awkward C, materialize just the
    # two used columns (~2N extra elements) and proceed with C = 2.
    if LANES % c != 0:
        x = jnp.stack([x[:, 0], x[:, 1]], axis=-1)
        c = 2

    group = LANES // c                       # batch rows per x-slab row

    # Slab geometry: both slabs have r_total rows; reshapes are zero-copy when
    # group | N, otherwise only the tiny tail is padded (masked in-kernel anyway).
    r_total = pl.cdiv(n, group)
    x_flat = x.reshape(-1)                   # free: row-major contiguous flatten
    x_pad = r_total * LANES - x_flat.shape[0]
    if x_pad:
        x_flat = jnp.pad(x_flat, (0, x_pad))
    y_pad = r_total * group - n
    if y_pad:
        y_flat = jnp.pad(y_flat, (0, y_pad))
    x_slab = x_flat.reshape(r_total, LANES)
    y_slab = y_flat.reshape(r_total, group)

    # Constant de-interleave / scale matrix (16 KiB, fetched once per buffer).
    g_ids = jnp.arange(group)
    w = jnp.zeros((LANES, group), jnp.float32)
    w = w.at[g_ids * c, g_ids].set(1000.0)
    w = w.at[g_ids * c + 1, g_ids].set(1.0)

    # Big blocks amortize the ~0.35 us/step fixed cost; clamp (multiple of 8
    # sublanes) for small inputs.
    br = min(block_rows, ((r_total + SUBLANES - 1) // SUBLANES) * SUBLANES)
    n_steps = pl.cdiv(r_total, br)

    kernel = functools.partial(_my_loss_kernel, n_valid=n, group=group,
                               block_rows=br)

    partials = pl.pallas_call(
        kernel,
        out_shape=jax.ShapeDtypeStruct((n_steps * SUBLANES, group), jnp.float32),
        grid_spec=pltpu.PrefetchScalarGridSpec(
            num_scalar_prefetch=0,
            grid=(n_steps,),
            in_specs=[
                pl.BlockSpec((br, LANES), lambda i: (i, 0)),     # flat x slab
                pl.BlockSpec((br, group), lambda i: (i, 0)),     # aligned y slab
                pl.BlockSpec((LANES, group), lambda i: (0, 0)),  # constant W
            ],
            out_specs=pl.BlockSpec((SUBLANES, group), lambda i: (i, 0)),
        ),
        compiler_params=pltpu.CompilerParams(
            # No cross-step state -> fully parallel; v7x shards across both TCs.
            dimension_semantics=("parallel",),
        ),
    )(x_slab, y_slab, w)

    # Single final reduction + mean divide (true N, not padded size).
    return jnp.sum(partials) / jnp.float32(n)


if __name__ == "__main__":
    key = jax.random.PRNGKey(0)
    kx1, ky1, kx2, ky2 = jax.random.split(key, 4)

    def ref_loss(x, y):
        pred = x[:, 0:1].astype(jnp.float32) * 1000.0 + x[:, 1:2].astype(jnp.float32)
        return jnp.mean((pred - y.reshape(-1, 1).astype(jnp.float32)) ** 2)

    # Case 1: aligned batch (fully zero-copy slabs), forced through Pallas.
    n1, c1 = 256, 4
    x1 = jax.random.normal(kx1, (n1, c1), dtype=jnp.float32)
    y1 = jax.random.normal(ky1, (n1, 1), dtype=jnp.float32)
    out1 = jax.block_until_ready(my_loss(x1, y1, force_pallas=True))
    assert jnp.allclose(out1, ref_loss(x1, y1), rtol=1e-5, atol=1e-5), (out1, ref_loss(x1, y1))

    # Case 2: ragged batch (exercises in-kernel tail masking), Pallas path.
    n2, c2 = 200, 4
    x2 = jax.random.normal(kx2, (n2, c2), dtype=jnp.float32)
    y2 = jax.random.normal(ky2, (n2, 1), dtype=jnp.float32)
    out2 = jax.block_until_ready(my_loss(x2, y2, force_pallas=True))
    assert jnp.allclose(out2, ref_loss(x2, y2), rtol=1e-5, atol=1e-5), (out2, ref_loss(x2, y2))

    # Case 3: tiny batch takes the fused-jnp fast path (no pallas_call), per review.
    x3, y3 = x1[:16], y1[:16]
    out3 = jax.block_until_ready(my_loss(x3, y3))
    assert jnp.allclose(out3, ref_loss(x3, y3), rtol=1e-5, atol=1e-5)

    print("KERNEL_OK")
</pallas_src>

<mosaic_0001>
module attributes {stable_mosaic.version = 11 : i64} {
  func.func @_my_loss_kernel(%arg0: i32, %arg1: memref<8x128xf32, #tpu.memory_space<vmem>>, %arg2: memref<8x32xf32, #tpu.memory_space<vmem>>, %arg3: memref<128x32xf32, #tpu.memory_space<vmem>>, %arg4: memref<8x32xf32, #tpu.memory_space<vmem>>) attributes {dimension_semantics = [#tpu.dimension_semantics<parallel>], iteration_bounds = array<i64: 1>, scalar_prefetch = 0 : i64, scratch_operands = 0 : i64, tpu.core_type = #tpu.core_type<tc>, window_params = [{transform_indices = @transform_0, window_bounds = array<i64: 8, 128>}, {transform_indices = @transform_1, window_bounds = array<i64: 8, 32>}, {pipeline_mode = #tpu.pipeline_mode<synchronous>, transform_indices = @transform_2, window_bounds = array<i64: 128, 32>}, {transform_indices = @transform_3, window_bounds = array<i64: 8, 32>}]} {
    %c0 = arith.constant 0 : index
    %c0_0 = arith.constant 0 : index
    %0 = vector.load %arg1[%c0, %c0_0] : memref<8x128xf32, #tpu.memory_space<vmem>>, vector<8x128xf32>
    %c0_1 = arith.constant 0 : index
    %c0_2 = arith.constant 0 : index
    %1 = vector.load %arg2[%c0_1, %c0_2] : memref<8x32xf32, #tpu.memory_space<vmem>>, vector<8x32xf32>
    %c0_3 = arith.constant 0 : index
    %c0_4 = arith.constant 0 : index
    %2 = vector.load %arg3[%c0_3, %c0_4] : memref<128x32xf32, #tpu.memory_space<vmem>>, vector<128x32xf32>
    %cst = arith.constant dense<0.000000e+00> : vector<8x32xf32>
    %3 = tpu.matmul %0, %2, %cst {dimension_numbers = #tpu.dot_dimension_numbers<[1], [0], [0], [1], [0, 0, 1, 1], [], []>, precision = #tpu.contract_precision<fp32>} : vector<8x128xf32>, vector<128x32xf32>, vector<8x32xf32> -> vector<8x32xf32>
    %4 = arith.subf %3, %1 : vector<8x32xf32>
    %5 = arith.mulf %4, %4 : vector<8x32xf32>
    %6 = tpu.iota {dimensions = array<i32: 0>} : vector<8x32xi32>
    %7 = tpu.iota {dimensions = array<i32: 1>} : vector<8x32xi32>
    %c8_i32 = arith.constant 8 : i32
    %8 = arith.muli %arg0, %c8_i32 : i32
    %9 = vector.broadcast %8 : i32 to vector<8x32xi32>
    %10 = arith.addi %9, %6 : vector<8x32xi32>
    %c32_i32 = arith.constant 32 : i32
    %11 = vector.broadcast %c32_i32 : i32 to vector<8x32xi32>
    %12 = arith.muli %10, %11 : vector<8x32xi32>
    %13 = arith.addi %12, %7 : vector<8x32xi32>
    %c256_i32 = arith.constant 256 : i32
    %14 = vector.broadcast %c256_i32 : i32 to vector<8x32xi32>
    %15 = arith.cmpi slt, %13, %14 : vector<8x32xi32>
    %cst_5 = arith.constant 0.000000e+00 : f32
    %16 = vector.broadcast %cst_5 : f32 to vector<8x32xf32>
    %17 = arith.select %15, %5, %16 : vector<8x32xi1>, vector<8x32xf32>
    %18 = vector.shape_cast %17 : vector<8x32xf32> to vector<1x8x32xf32>
    %cst_6 = arith.constant dense<0.000000e+00> : vector<8x32xf32>
    %19 = vector.multi_reduction <add>, %18, %cst_6 [0] : vector<1x8x32xf32> to vector<8x32xf32>
    %c0_7 = arith.constant 0 : index
    %c0_8 = arith.constant 0 : index
    %20 = vector.load %arg4[%c0_7, %c0_8] : memref<8x32xf32, #tpu.memory_space<vmem>>, vector<8x32xf32>
    tpu.vector_store %arg4[%c0_7, %c0_8], %19 {strides = array<i32>} : memref<8x32xf32, #tpu.memory_space<vmem>>, vector<8x32xf32>,
    return
  }
  func.func @transform_0(%arg0: i32) -> (i32, i32) {
    %c0_i32 = arith.constant 0 : i32
    %c0_i32_0 = arith.constant 0 : i32
    return %arg0, %c0_i32 : i32, i32
  }
  func.func @transform_1(%arg0: i32) -> (i32, i32) {
    %c0_i32 = arith.constant 0 : i32
    %c0_i32_0 = arith.constant 0 : i32
    return %arg0, %c0_i32 : i32, i32
  }
  func.func @transform_2(%arg0: i32) -> (i32, i32) {
    %c0_i32 = arith.constant 0 : i32
    %c0_i32_0 = arith.constant 0 : i32
    %c0_i32_1 = arith.constant 0 : i32
    return %c0_i32, %c0_i32_0 : i32, i32
  }
  func.func @transform_3(%arg0: i32) -> (i32, i32) {
    %c0_i32 = arith.constant 0 : i32
    %c0_i32_0 = arith.constant 0 : i32
    return %arg0, %c0_i32 : i32, i32
  }
}

</mosaic_0001>

<llo_original>
// kernel: tpu_custom_call.1
$region0: #{tpu_custom_call.1}
  #allocation0 [shape = 'u32[]', space=smem, size = 0x4, offset = 0x4, fixed_abs, tag = 'smem constant byte address 0x4 - core index']
  #allocation1 [shape = 'u32[72,128]{1,0:T(1,128)}', space=vmem, size = 0x9000, scoped, tag = 'internal scratch']
  %s0 = inlined_call_operand.vmem [shape: f32[8,128], index: 0, kind: input, shape index: {}]
  %s1 = inlined_call_operand.vmem [shape: f32[8,32], index: 1, kind: input, shape index: {}]
  %s2 = inlined_call_operand.vmem [shape: f32[128,32], index: 2, kind: input, shape index: {}]
  %s3 = inlined_call_operand.hbm [shape: f32[8,32], index: 3, kind: output, shape index: {}]
  %s4 = sld [smem:[#allocation0]]
  $region22: #{tpu_custom_call.1} parent=0
    _
  %s6 = ssub.s32 1, %s4
  %s7 = scalar_select 0, %s6, %s4
  $region1: #{tpu_custom_call.1} parent=0
    #allocation2 [shape = 'u8[4096]{0}', space=vmem, size = 0x1000, scoped, tag = 'output window, operand 0, single buffered']
    #allocation3 [shape = 's32[1]{0}', space=sflag, size = 0x4, scoped, tag = 'scoped memory for tpu_custom_call.1']
    %8 = vsyncpa [#allocation3], 0
    // Predicated region
    $region2: #{tpu_custom_call.1} parent=1 // pred_check
      _
    $region3: #{tpu_custom_call.1} parent=1 // pred_check_branch
      %10 = sbr.rel (0) target = $region5
    $region4: #{tpu_custom_call.1} parent=1 // pred_region
      _
    $region5: #{tpu_custom_call.1} parent=1 // pred_fallthru
      _
    // Predicated region
    $region6: #{tpu_custom_call.1} parent=1 // pred_check
      _
    $region7: #{tpu_custom_call.1} parent=1 // pred_check_branch
      %12 = sbr.rel (0) target = $region9
    $region8: #{tpu_custom_call.1} parent=1 // pred_region
      _
    $region9: #{tpu_custom_call.1} parent=1 // pred_fallthru
      _
    // Predicated region
    $region10: #{tpu_custom_call.1} parent=1 // pred_check
      _
    $region11: #{tpu_custom_call.1} parent=1 // pred_check_branch
      %14 = sbr.rel (0) target = $region13
    $region12: #{tpu_custom_call.1} parent=1 // pred_region
      _
    $region13: #{tpu_custom_call.1} parent=1 // pred_fallthru
      _
    %v15 = vld [vmem:[%s0] sm:$0xff]
    %v16 = vld [vmem:[%s1] sm:$0xff]
    %v17 = vld [vmem:[%s2] sm:$0xff]
    %v18 = vld [vmem:[%s2 + $0x8] sm:$0xff]
    %v19 = vld [vmem:[%s2 + $0x10] sm:$0xff]
    %v20 = vld [vmem:[%s2 + $0x18] sm:$0xff]
    %v21 = vld [vmem:[%s2 + $0x20] sm:$0xff]
    %v22 = vld [vmem:[%s2 + $0x28] sm:$0xff]
    %v23 = vld [vmem:[%s2 + $0x30] sm:$0xff]
    %v24 = vld [vmem:[%s2 + $0x38] sm:$0xff]
    %v25 = vld [vmem:[%s2 + $0x40] sm:$0xff]
    %v26 = vld [vmem:[%s2 + $0x48] sm:$0xff]
    %v27 = vld [vmem:[%s2 + $0x50] sm:$0xff]
    %v28 = vld [vmem:[%s2 + $0x58] sm:$0xff]
    %v29 = vld [vmem:[%s2 + $0x60] sm:$0xff]
    %v30 = vld [vmem:[%s2 + $0x68] sm:$0xff]
    %v31 = vld [vmem:[%s2 + $0x70] sm:$0xff]
    %v32 = vld [vmem:[%s2 + $0x78] sm:$0xff]
    %v33 = vand.u32 %v32, 4294901760
    %34 = vmatpush.msra.mxu0 %v33
    %v35 = vand.u32 %v31, 4294901760
    %36 = vmatpush.msra.mxu0 %v35
    %v37 = vand.u32 %v30, 4294901760
    %38 = vmatpush.msra.mxu0 %v37
    %v39 = vand.u32 %v29, 4294901760
    %40 = vmatpush.msra.mxu0 %v39
    %v41 = vand.u32 %v28, 4294901760
    %42 = vmatpush.msra.mxu0 %v41
    %v43 = vand.u32 %v27, 4294901760
    %44 = vmatpush.msra.mxu0 %v43
    %v45 = vand.u32 %v26, 4294901760
    %46 = vmatpush.msra.mxu0 %v45
    %v47 = vand.u32 %v25, 4294901760
    %48 = vmatpush.msra.mxu0 %v47
    %v49 = vand.u32 %v24, 4294901760
    %50 = vmatpush.msra.mxu0 %v49
    %v51 = vand.u32 %v23, 4294901760
    %52 = vmatpush.msra.mxu0 %v51
    %v53 = vand.u32 %v22, 4294901760
    %54 = vmatpush.msra.mxu0 %v53
    %v55 = vand.u32 %v21, 4294901760
    %56 = vmatpush.msra.mxu0 %v55
    %v57 = vand.u32 %v20, 4294901760
    %58 = vmatpush.msra.mxu0 %v57
    %v59 = vand.u32 %v19, 4294901760
    %60 = vmatpush.msra.mxu0 %v59
    %v61 = vand.u32 %v18, 4294901760
    %62 = vmatpush.msra.mxu0 %v61
    %v63 = vand.u32 %v17, 4294901760
    %64 = vmatpush.msra.mxu0 %v63
    %v65 = vand.u32 %v15, 4294901760
    %v66 = vsub.f32 %v15, %v65
    %v67 = vand.u32 %v66, 4294901760
    %v68 = vsub.f32 %v66, %v67
    %v69 = vand.u32 %v68, 4294901760
    %70 = vmatmul.f32.gmra.mxu0 %v69
    %v71 = vpop.f32.mrf.mxu0
    %v72 = vadd.f32 0.0, %v71
    %73 = vdwg.mxu0
    %v74 = vand.u32 %v32, 4294901760
    %v75 = vsub.f32 %v32, %v74
    %v76 = vand.u32 %v75, 4294901760
    %v77 = vsub.f32 %v75, %v76
    %v78 = vand.u32 %v77, 4294901760
    %79 = vmatpush.msra.mxu0 %v78
    %v80 = vand.u32 %v31, 4294901760
    %v81 = vsub.f32 %v31, %v80
    %v82 = vand.u32 %v81, 4294901760
    %v83 = vsub.f32 %v81, %v82
    %v84 = vand.u32 %v83, 4294901760
    %85 = vmatpush.msra.mxu0 %v84
    %v86 = vand.u32 %v30, 4294901760
    %v87 = vsub.f32 %v30, %v86
    %v88 = vand.u32 %v87, 4294901760
    %v89 = vsub.f32 %v87, %v88
    %v90 = vand.u32 %v89, 4294901760
    %91 = vmatpush.msra.mxu0 %v90
    %v92 = vand.u32 %v29, 4294901760
    %v93 = vsub.f32 %v29, %v92
    %v94 = vand.u32 %v93, 4294901760
    %v95 = vsub.f32 %v93, %v94
    %v96 = vand.u32 %v95, 4294901760
    %97 = vmatpush.msra.mxu0 %v96
    %v98 = vand.u32 %v28, 4294901760
    %v99 = vsub.f32 %v28, %v98
    %v100 = vand.u32 %v99, 4294901760
    %v101 = vsub.f32 %v99, %v100
    %v102 = vand.u32 %v101, 4294901760
    %103 = vmatpush.msra.mxu0 %v102
    %v104 = vand.u32 %v27, 4294901760
    %v105 = vsub.f32 %v27, %v104
    %v106 = vand.u32 %v105, 4294901760
    %v107 = vsub.f32 %v105, %v106
    %v108 = vand.u32 %v107, 4294901760
    %109 = vmatpush.msra.mxu0 %v108
    %v110 = vand.u32 %v26, 4294901760
    %v111 = vsub.f32 %v26, %v110
    %v112 = vand.u32 %v111, 4294901760
    %v113 = vsub.f32 %v111, %v112
    %v114 = vand.u32 %v113, 4294901760
    %115 = vmatpush.msra.mxu0 %v114
    %v116 = vand.u32 %v25, 4294901760
    %v117 = vsub.f32 %v25, %v116
    %v118 = vand.u32 %v117, 4294901760
    %v119 = vsub.f32 %v117, %v118
    %v120 = vand.u32 %v119, 4294901760
    %121 = vmatpush.msra.mxu0 %v120
    %v122 = vand.u32 %v24, 4294901760
    %v123 = vsub.f32 %v24, %v122
    %v124 = vand.u32 %v123, 4294901760
    %v125 = vsub.f32 %v123, %v124
    %v126 = vand.u32 %v125, 4294901760
    %127 = vmatpush.msra.mxu0 %v126
    %v128 = vand.u32 %v23, 4294901760
    %v129 = vsub.f32 %v23, %v128
    %v130 = vand.u32 %v129, 4294901760
    %v131 = vsub.f32 %v129, %v130
    %v132 = vand.u32 %v131, 4294901760
    %133 = vmatpush.msra.mxu0 %v132
    %v134 = vand.u32 %v22, 4294901760
    %v135 = vsub.f32 %v22, %v134
    %v136 = vand.u32 %v135, 4294901760
    %v137 = vsub.f32 %v135, %v136
    %v138 = vand.u32 %v137, 4294901760
    %139 = vmatpush.msra.mxu0 %v138
    %v140 = vand.u32 %v21, 4294901760
    %v141 = vsub.f32 %v21, %v140
    %v142 = vand.u32 %v141, 4294901760
    %v143 = vsub.f32 %v141, %v142
    %v144 = vand.u32 %v143, 4294901760
    %145 = vmatpush.msra.mxu0 %v144
    %v146 = vand.u32 %v20, 4294901760
    %v147 = vsub.f32 %v20, %v146
    %v148 = vand.u32 %v147, 4294901760
    %v149 = vsub.f32 %v147, %v148
    %v150 = vand.u32 %v149, 4294901760
    %151 = vmatpush.msra.mxu0 %v150
    %v152 = vand.u32 %v19, 4294901760
    %v153 = vsub.f32 %v19, %v152
    %v154 = vand.u32 %v153, 4294901760
    %v155 = vsub.f32 %v153, %v154
    %v156 = vand.u32 %v155, 4294901760
    %157 = vmatpush.msra.mxu0 %v156
    %v158 = vand.u32 %v18, 4294901760
    %v159 = vsub.f32 %v18, %v158
    %v160 = vand.u32 %v159, 4294901760
    %v161 = vsub.f32 %v159, %v160
    %v162 = vand.u32 %v161, 4294901760
    %163 = vmatpush.msra.mxu0 %v162
    %v164 = vand.u32 %v17, 4294901760
    %v165 = vsub.f32 %v17, %v164
    %v166 = vand.u32 %v165, 4294901760
    %v167 = vsub.f32 %v165, %v166
    %v168 = vand.u32 %v167, 4294901760
    %169 = vmatpush.msra.mxu0 %v168
    %v170 = vand.u32 %v15, 4294901760
    %171 = vmatmul.f32.gmra.mxu0 %v170
    %v172 = vpop.f32.mrf.mxu0
    %v173 = vadd.f32 %v72, %v172
    %174 = vdwg.mxu0
    %v175 = vand.u32 %v32, 4294901760
    %v176 = vsub.f32 %v32, %v175
    %177 = vmatpush.msra.mxu0 %v176
    %v178 = vand.u32 %v31, 4294901760
    %v179 = vsub.f32 %v31, %v178
    %180 = vmatpush.msra.mxu0 %v179
    %v181 = vand.u32 %v30, 4294901760
    %v182 = vsub.f32 %v30, %v181
    %183 = vmatpush.msra.mxu0 %v182
    %v184 = vand.u32 %v29, 4294901760
    %v185 = vsub.f32 %v29, %v184
    %186 = vmatpush.msra.mxu0 %v185
    %v187 = vand.u32 %v28, 4294901760
    %v188 = vsub.f32 %v28, %v187
    %189 = vmatpush.msra.mxu0 %v188
    %v190 = vand.u32 %v27, 4294901760
    %v191 = vsub.f32 %v27, %v190
    %192 = vmatpush.msra.mxu0 %v191
    %v193 = vand.u32 %v26, 4294901760
    %v194 = vsub.f32 %v26, %v193
    %195 = vmatpush.msra.mxu0 %v194
    %v196 = vand.u32 %v25, 4294901760
    %v197 = vsub.f32 %v25, %v196
    %198 = vmatpush.msra.mxu0 %v197
    %v199 = vand.u32 %v24, 4294901760
    %v200 = vsub.f32 %v24, %v199
    %201 = vmatpush.msra.mxu0 %v200
    %v202 = vand.u32 %v23, 4294901760
    %v203 = vsub.f32 %v23, %v202
    %204 = vmatpush.msra.mxu0 %v203
    %v205 = vand.u32 %v22, 4294901760
    %v206 = vsub.f32 %v22, %v205
    %207 = vmatpush.msra.mxu0 %v206
    %v208 = vand.u32 %v21, 4294901760
    %v209 = vsub.f32 %v21, %v208
    %210 = vmatpush.msra.mxu0 %v209
    %v211 = vand.u32 %v20, 4294901760
    %v212 = vsub.f32 %v20, %v211
    %213 = vmatpush.msra.mxu0 %v212
    %v214 = vand.u32 %v19, 4294901760
    %v215 = vsub.f32 %v19, %v214
    %216 = vmatpush.msra.mxu0 %v215
    %v217 = vand.u32 %v18, 4294901760
    %v218 = vsub.f32 %v18, %v217
    %219 = vmatpush.msra.mxu0 %v218
    %v220 = vand.u32 %v17, 4294901760
    %v221 = vsub.f32 %v17, %v220
    %222 = vmatpush.msra.mxu0 %v221
    %v223 = vand.u32 %v15, 4294901760
    %v224 = vsub.f32 %v15, %v223
    %225 = vmatmul.f32.gmra.mxu0 %v224
    %v226 = vpop.f32.mrf.mxu0
    %v227 = vadd.f32 %v173, %v226
    %228 = vdwg.mxu0
    %v229 = vand.u32 %v32, 4294901760
    %230 = vmatpush.msra.mxu0 %v229
    %v231 = vand.u32 %v31, 4294901760
    %232 = vmatpush.msra.mxu0 %v231
    %v233 = vand.u32 %v30, 4294901760
    %234 = vmatpush.msra.mxu0 %v233
    %v235 = vand.u32 %v29, 4294901760
    %236 = vmatpush.msra.mxu0 %v235
    %v237 = vand.u32 %v28, 4294901760
    %238 = vmatpush.msra.mxu0 %v237
    %v239 = vand.u32 %v27, 4294901760
    %240 = vmatpush.msra.mxu0 %v239
    %v241 = vand.u32 %v26, 4294901760
    %242 = vmatpush.msra.mxu0 %v241
    %v243 = vand.u32 %v25, 4294901760
    %244 = vmatpush.msra.mxu0 %v243
    %v245 = vand.u32 %v24, 4294901760
    %246 = vmatpush.msra.mxu0 %v245
    %v247 = vand.u32 %v23, 4294901760
    %248 = vmatpush.msra.mxu0 %v247
    %v249 = vand.u32 %v22, 4294901760
    %250 = vmatpush.msra.mxu0 %v249
    %v251 = vand.u32 %v21, 4294901760
    %252 = vmatpush.msra.mxu0 %v251
    %v253 = vand.u32 %v20, 4294901760
    %254 = vmatpush.msra.mxu0 %v253
    %v255 = vand.u32 %v19, 4294901760
    %256 = vmatpush.msra.mxu0 %v255
    %v257 = vand.u32 %v18, 4294901760
    %258 = vmatpush.msra.mxu0 %v257
    %v259 = vand.u32 %v17, 4294901760
    %260 = vmatpush.msra.mxu0 %v259
    %v261 = vand.u32 %v15, 4294901760
    %v262 = vsub.f32 %v15, %v261
    %v263 = vand.u32 %v262, 4294901760
    %264 = vmatmul.f32.gmra.mxu0 %v263
    %v265 = vpop.f32.mrf.mxu0
    %v266 = vadd.f32 %v227, %v265
    %267 = vdwg.mxu0
    %v268 = vand.u32 %v32, 4294901760
    %v269 = vsub.f32 %v32, %v268
    %v270 = vand.u32 %v269, 4294901760
    %271 = vmatpush.msra.mxu0 %v270
    %v272 = vand.u32 %v31, 4294901760
    %v273 = vsub.f32 %v31, %v272
    %v274 = vand.u32 %v273, 4294901760
    %275 = vmatpush.msra.mxu0 %v274
    %v276 = vand.u32 %v30, 4294901760
    %v277 = vsub.f32 %v30, %v276
    %v278 = vand.u32 %v277, 4294901760
    %279 = vmatpush.msra.mxu0 %v278
    %v280 = vand.u32 %v29, 4294901760
    %v281 = vsub.f32 %v29, %v280
    %v282 = vand.u32 %v281, 4294901760
    %283 = vmatpush.msra.mxu0 %v282
    %v284 = vand.u32 %v28, 4294901760
    %v285 = vsub.f32 %v28, %v284
    %v286 = vand.u32 %v285, 4294901760
    %287 = vmatpush.msra.mxu0 %v286
    %v288 = vand.u32 %v27, 4294901760
    %v289 = vsub.f32 %v27, %v288
    %v290 = vand.u32 %v289, 4294901760
    %291 = vmatpush.msra.mxu0 %v290
    %v292 = vand.u32 %v26, 4294901760
    %v293 = vsub.f32 %v26, %v292
    %v294 = vand.u32 %v293, 4294901760
    %295 = vmatpush.msra.mxu0 %v294
    %v296 = vand.u32 %v25, 4294901760
    %v297 = vsub.f32 %v25, %v296
    %v298 = vand.u32 %v297, 4294901760
    %299 = vmatpush.msra.mxu0 %v298
    %v300 = vand.u32 %v24, 4294901760
    %v301 = vsub.f32 %v24, %v300
    %v302 = vand.u32 %v301, 4294901760
    %303 = vmatpush.msra.mxu0 %v302
    %v304 = vand.u32 %v23, 4294901760
    %v305 = vsub.f32 %v23, %v304
    %v306 = vand.u32 %v305, 4294901760
    %307 = vmatpush.msra.mxu0 %v306
    %v308 = vand.u32 %v22, 4294901760
    %v309 = vsub.f32 %v22, %v308
    %v310 = vand.u32 %v309, 4294901760
    %311 = vmatpush.msra.mxu0 %v310
    %v312 = vand.u32 %v21, 4294901760
    %v313 = vsub.f32 %v21, %v312
    %v314 = vand.u32 %v313, 4294901760
    %315 = vmatpush.msra.mxu0 %v314
    %v316 = vand.u32 %v20, 4294901760
    %v317 = vsub.f32 %v20, %v316
    %v318 = vand.u32 %v317, 4294901760
    %319 = vmatpush.msra.mxu0 %v318
    %v320 = vand.u32 %v19, 4294901760
    %v321 = vsub.f32 %v19, %v320
    %v322 = vand.u32 %v321, 4294901760
    %323 = vmatpush.msra.mxu0 %v322
    %v324 = vand.u32 %v18, 4294901760
    %v325 = vsub.f32 %v18, %v324
    %v326 = vand.u32 %v325, 4294901760
    %327 = vmatpush.msra.mxu0 %v326
    %v328 = vand.u32 %v17, 4294901760
    %v329 = vsub.f32 %v17, %v328
    %v330 = vand.u32 %v329, 4294901760
    %331 = vmatpush.msra.mxu0 %v330
    %v332 = vand.u32 %v15, 4294901760
    %333 = vmatmul.f32.gmra.mxu0 %v332
    %v334 = vpop.f32.mrf.mxu0
    %v335 = vadd.f32 %v266, %v334
    %336 = vdwg.mxu0
    %v337 = vand.u32 %v32, 4294901760
    %338 = vmatpush.msra.mxu0 %v337
    %v339 = vand.u32 %v31, 4294901760
    %340 = vmatpush.msra.mxu0 %v339
    %v341 = vand.u32 %v30, 4294901760
    %342 = vmatpush.msra.mxu0 %v341
    %v343 = vand.u32 %v29, 4294901760
    %344 = vmatpush.msra.mxu0 %v343
    %v345 = vand.u32 %v28, 4294901760
    %346 = vmatpush.msra.mxu0 %v345
    %v347 = vand.u32 %v27, 4294901760
    %348 = vmatpush.msra.mxu0 %v347
    %v349 = vand.u32 %v26, 4294901760
    %350 = vmatpush.msra.mxu0 %v349
    %v351 = vand.u32 %v25, 4294901760
    %352 = vmatpush.msra.mxu0 %v351
    %v353 = vand.u32 %v24, 4294901760
    %354 = vmatpush.msra.mxu0 %v353
    %v355 = vand.u32 %v23, 4294901760
    %356 = vmatpush.msra.mxu0 %v355
    %v357 = vand.u32 %v22, 4294901760
    %358 = vmatpush.msra.mxu0 %v357
    %v359 = vand.u32 %v21, 4294901760
    %360 = vmatpush.msra.mxu0 %v359
    %v361 = vand.u32 %v20, 4294901760
    %362 = vmatpush.msra.mxu0 %v361
    %v363 = vand.u32 %v19, 4294901760
    %364 = vmatpush.msra.mxu0 %v363
    %v365 = vand.u32 %v18, 4294901760
    %366 = vmatpush.msra.mxu0 %v365
    %v367 = vand.u32 %v17, 4294901760
    %368 = vmatpush.msra.mxu0 %v367
    %v369 = vand.u32 %v15, 4294901760
    %370 = vmatmul.f32.gmra.mxu0 %v369
    %v371 = vpop.f32.mrf.mxu0
    %v372 = vadd.f32 %v335, %v371
    %373 = vdwg.mxu0
    %v374 = vsub.f32 %v372, %v16
    %v375 = vmul.f32 %v374, %v374
    %v376 = vlaneseq
    %v377 = vshrl.u32 %v376, 7
    %v378 = vlaneseq
    %v379 = vand.u32 %v378, 127
    %s380 = smul.u32 0, 8
    %v381 = vstv %s380
    %v382 = vadd.s32 %v381, %v377
    %v383 = vmul.u32 %v382, 32
    %v384 = vadd.s32 %v383, %v379
    %vm385 = vcmp.lt.s32.totalorder %v384, 256
    %v386 = vsel %vm385, %v375, 0.0
    %v387 = vadd.f32 %v386, 0.0
    %vm388 = vcmask 261120
    %389 = vst.msk [vmem:[#allocation2] sm:$0xff] %vm388, %v387
    // Predicated region
    $region14: #{tpu_custom_call.1} parent=1 // pred_check
      _
    $region15: #{tpu_custom_call.1} parent=1 // pred_check_branch
      %391 = sbr.rel (0) target = $region17
    $region16: #{tpu_custom_call.1} parent=1 // pred_region
      %393 = vsyncadd [#allocation3], 0
      %s395 = sshll.u32 [#allocation2], 4
      %s396 = int_to_ptr.vmem [resolvable:$true] %s395
      %s397 = sshll.u32 %s3, 4
      %s398 = int_to_ptr.hbm [resolvable:$true] %s397
      %400 = dma.vmem_to_hbm [thread:$0]  %s396, 128, %s398, [#allocation3]
    $region17: #{tpu_custom_call.1} parent=1 // pred_fallthru
      _
    // Predicated region
    $region18: #{tpu_custom_call.1} parent=1 // pred_check
      _
    $region19: #{tpu_custom_call.1} parent=1 // pred_check_branch
      %402 = sbr.rel (0) target = $region21
    $region20: #{tpu_custom_call.1} parent=1 // pred_region
      %404 = dma.done [#allocation3], 128
    $region21: #{tpu_custom_call.1} parent=1 // pred_fallthru
      _
    %405 = vsyncpa [#allocation3], 1

</llo_original>
